<compile_context>
chip_gen: v7x
topology: tpu7x:2x2x1
jax: 0.10.0
libtpu: 0.0.40
codegen_flags: <defaults>
</compile_context>

<pallas_src>
import functools

import jax
import jax.numpy as jnp
import numpy as np
from jax.experimental import pallas as pl
from jax.experimental.pallas import tpu as pltpu


# ----------------------------- Pallas kernel --------------------------------


def _loss_kernel(recon_ref, x_ref, mu_ref, lv_ref, out_ref,
                 acc_lin, acc_dx, acc_dr, *,
                 lamb, kappa, num_samples, num_features):
    # recon/x : (tp, 2*F) f32 -- row p holds [sample 2p | sample 2p+1] along lanes
    # mu/lv   : (2*tp, L) f32
    # out     : (1, 1)   f32
    # acc_*   : (1, 1)   f32 VMEM accumulators, persistent across grid steps
    step = pl.program_id(0)

    @pl.when(step == 0)
    def _init():
        acc_lin[...] = jnp.zeros_like(acc_lin)
        acc_dx[...] = jnp.zeros_like(acc_dx)
        acc_dr[...] = jnp.zeros_like(acc_dr)

    r = recon_ref[...]
    t = x_ref[...]

    # MSE (reduction='sum') partial
    d = r - t
    mse_p = jnp.sum(d * d, keepdims=True)                       # (1, 1)

    # KLD partial
    mu = mu_ref[...]
    lv = lv_ref[...]
    kld_p = -0.5 * jnp.sum(1.0 + lv - mu * mu - jnp.exp(lv), keepdims=True)

    acc_lin[...] += mse_p + lamb * kld_p

    # VAR term -- trace-time branch, matching the PyTorch `if self.kappa != 0`.
    if kappa != 0:
        F = num_features
        dx = t[:, :F] - t[:, F:]                                # x[2p]     - x[2p+1]
        dr = r[:, :F] - r[:, F:]                                # recon[2p] - recon[2p+1]
        acc_dx[...] += jnp.sum(dx * dx, keepdims=True)
        acc_dr[...] += jnp.sum(dr * dr, keepdims=True)

    @pl.when(step == pl.num_programs(0) - 1)
    def _finalize():
        loss = acc_lin[...]
        if kappa != 0:
            loss = loss + (kappa / num_samples) * jnp.abs(acc_dx[...] - acc_dr[...])
        out_ref[...] = loss


# ------------------------------ JAX wrapper ---------------------------------


def _pick_pair_tile(P):
    # Largest pair-tile <= 512 that divides P and is a multiple of 8 (so both
    # the (tp, 2F) and (2*tp, L) blocks satisfy the sublane constraint);
    # otherwise fall back to the full extent (single grid step).
    for tp in (512, 256, 128, 64, 32, 16, 8):
        if P % tp == 0:
            return tp
    return P


@functools.partial(jax.jit,
                   static_argnames=("lamb", "kappa", "y_size", "x_size"))
def loss_function_forward(recon_x, x, mu, log_var, *, lamb, kappa, y_size, x_size):
    B = x.shape[0]
    F = y_size * x_size
    L = mu.shape[-1]
    assert B % 2 == 0, "comp_VAR pairs consecutive samples; batch must be even"
    P = B // 2

    # Fold each consecutive sample pair into one lane-dense row (contiguous,
    # zero-cost reshape):  row p = [sample 2p (F lanes) | sample 2p+1 (F lanes)].
    x2 = x.reshape(P, 2 * F).astype(jnp.float32)
    r2 = recon_x.reshape(P, 2 * F).astype(jnp.float32)
    mu2 = mu.reshape(B, L).astype(jnp.float32)
    lv2 = log_var.reshape(B, L).astype(jnp.float32)

    tp = _pick_pair_tile(P)
    grid = (P // tp,)

    out = pl.pallas_call(
        functools.partial(_loss_kernel,
                          lamb=float(lamb), kappa=float(kappa),
                          num_samples=B, num_features=F),
        out_shape=jax.ShapeDtypeStruct((1, 1), jnp.float32),
        grid_spec=pltpu.PrefetchScalarGridSpec(
            num_scalar_prefetch=0,
            grid=grid,
            in_specs=[
                pl.BlockSpec((tp, 2 * F), lambda i: (i, 0)),        # recon pairs
                pl.BlockSpec((tp, 2 * F), lambda i: (i, 0)),        # x pairs
                pl.BlockSpec((2 * tp, L), lambda i: (i, 0)),        # mu
                pl.BlockSpec((2 * tp, L), lambda i: (i, 0)),        # log_var
            ],
            out_specs=pl.BlockSpec((1, 1), lambda i: (0, 0)),
            scratch_shapes=[pltpu.VMEM((1, 1), jnp.float32),        # acc_lin
                            pltpu.VMEM((1, 1), jnp.float32),        # acc_dx
                            pltpu.VMEM((1, 1), jnp.float32)],       # acc_dr
        ),
        compiler_params=pltpu.CompilerParams(
            dimension_semantics=("arbitrary",)),                    # reduction axis
    )(r2, x2, mu2, lv2)
    return out[0, 0]


# ------------------------------- reference ----------------------------------


def reference_loss(recon_x, x, mu, log_var, lamb, kappa, y_size, x_size):
    """Pure-JAX replica of the PyTorch loss_function.forward, for verification."""
    F = y_size * x_size

    def comp_var(a):
        a_flat = a.reshape(-1, F)
        n = a_flat.shape[0]
        pairs = a_flat.reshape(n // 2, 2, F)
        return jnp.sum((pairs[:, 0, :] - pairs[:, 1, :]) ** 2) / n

    mse = jnp.sum((recon_x - x) ** 2)
    kld = -0.5 * jnp.sum(1.0 + log_var - mu ** 2 - jnp.exp(log_var))
    var = 0.0
    if kappa != 0:
        var = jnp.abs(comp_var(x) - comp_var(recon_x))
    return mse + lamb * kld + kappa * var


# ----------------------------------- main ------------------------------------


if __name__ == "__main__":
    LAMB, KAPPA = 0.5, 2.0

    def make_inputs(batch, y, x_sz, latent, seed):
        key = jax.random.PRNGKey(seed)
        k_x, k_r, k_mu, k_lv = jax.random.split(key, 4)
        x = jax.random.uniform(k_x, (batch, 1, y, x_sz), jnp.float32)
        recon = jax.nn.sigmoid(jax.random.normal(k_r, (batch, 1, y, x_sz), jnp.float32))
        mu = 0.5 * jax.random.normal(k_mu, (batch, latent), jnp.float32)
        lv = 0.1 * jax.random.normal(k_lv, (batch, latent), jnp.float32)
        return recon, x, mu, lv

    # --- small case (single grid step), kappa != 0 and kappa == 0 -------------
    Y, X, LATENT, BATCH = 16, 16, 8, 4
    recon_x, x, mu, log_var = make_inputs(BATCH, Y, X, LATENT, 0)

    loss = loss_function_forward(recon_x, x, mu, log_var,
                                 lamb=LAMB, kappa=KAPPA, y_size=Y, x_size=X)
    jax.block_until_ready(loss)
    loss0 = loss_function_forward(recon_x, x, mu, log_var,
                                  lamb=LAMB, kappa=0.0, y_size=Y, x_size=X)
    jax.block_until_ready(loss0)

    ref = reference_loss(recon_x, x, mu, log_var, LAMB, KAPPA, Y, X)
    ref0 = reference_loss(recon_x, x, mu, log_var, LAMB, 0.0, Y, X)
    np.testing.assert_allclose(np.asarray(loss), np.asarray(ref), atol=1e-3, rtol=1e-4)
    np.testing.assert_allclose(np.asarray(loss0), np.asarray(ref0), atol=1e-3, rtol=1e-4)

    # --- larger case (exercises the multi-step grid / accumulator path) -------
    BATCH_L = 2048
    recon_l, x_l, mu_l, lv_l = make_inputs(BATCH_L, Y, X, LATENT, 1)
    loss_l = loss_function_forward(recon_l, x_l, mu_l, lv_l,
                                   lamb=LAMB, kappa=KAPPA, y_size=Y, x_size=X)
    jax.block_until_ready(loss_l)
    ref_l = reference_loss(recon_l, x_l, mu_l, lv_l, LAMB, KAPPA, Y, X)
    np.testing.assert_allclose(np.asarray(loss_l), np.asarray(ref_l),
                               atol=1e-2, rtol=5e-4)

    print("KERNEL_OK")
</pallas_src>

<mosaic_0001>
module attributes {stable_mosaic.version = 11 : i64} {
  func.func @_loss_kernel(%arg0: i32, %arg1: memref<2x512xf32, #tpu.memory_space<vmem>>, %arg2: memref<2x512xf32, #tpu.memory_space<vmem>>, %arg3: memref<4x8xf32, #tpu.memory_space<vmem>>, %arg4: memref<4x8xf32, #tpu.memory_space<vmem>>, %arg5: memref<1x1xf32, #tpu.memory_space<vmem>>, %arg6: memref<1x1xf32, #tpu.memory_space<vmem>>, %arg7: memref<1x1xf32, #tpu.memory_space<vmem>>, %arg8: memref<1x1xf32, #tpu.memory_space<vmem>>) attributes {dimension_semantics = [#tpu.dimension_semantics<arbitrary>], iteration_bounds = array<i64: 1>, scalar_prefetch = 0 : i64, scratch_operands = 3 : i64, tpu.core_type = #tpu.core_type<tc>, window_params = [{transform_indices = @transform_0, window_bounds = array<i64: 2, 512>}, {transform_indices = @transform_1, window_bounds = array<i64: 2, 512>}, {transform_indices = @transform_2, window_bounds = array<i64: 4, 8>}, {transform_indices = @transform_3, window_bounds = array<i64: 4, 8>}, {pipeline_mode = #tpu.pipeline_mode<synchronous>, transform_indices = @transform_4, window_bounds = array<i64: 1, 1>}]} {
    %c0_i32 = arith.constant 0 : i32
    %0 = arith.cmpi eq, %arg0, %c0_i32 : i32
    %1 = arith.extui %0 : i1 to i32
    %c0_i32_0 = arith.constant 0 : i32
    %2 = arith.cmpi ne, %1, %c0_i32_0 : i32
    scf.if %2 {
      %cst_28 = arith.constant 0.000000e+00 : f32
      %60 = vector.broadcast %cst_28 : f32 to vector<1x1xf32>
      %c0_29 = arith.constant 0 : index
      %c0_30 = arith.constant 0 : index
      %61 = vector.load %arg6[%c0_29, %c0_30] : memref<1x1xf32, #tpu.memory_space<vmem>>, vector<1x1xf32>
      tpu.vector_store %arg6[%c0_29, %c0_30], %60 {strides = array<i32>} : memref<1x1xf32, #tpu.memory_space<vmem>>, vector<1x1xf32>,
      %cst_31 = arith.constant 0.000000e+00 : f32
      %62 = vector.broadcast %cst_31 : f32 to vector<1x1xf32>
      %c0_32 = arith.constant 0 : index
      %c0_33 = arith.constant 0 : index
      %63 = vector.load %arg7[%c0_32, %c0_33] : memref<1x1xf32, #tpu.memory_space<vmem>>, vector<1x1xf32>
      tpu.vector_store %arg7[%c0_32, %c0_33], %62 {strides = array<i32>} : memref<1x1xf32, #tpu.memory_space<vmem>>, vector<1x1xf32>,
      %cst_34 = arith.constant 0.000000e+00 : f32
      %64 = vector.broadcast %cst_34 : f32 to vector<1x1xf32>
      %c0_35 = arith.constant 0 : index
      %c0_36 = arith.constant 0 : index
      %65 = vector.load %arg8[%c0_35, %c0_36] : memref<1x1xf32, #tpu.memory_space<vmem>>, vector<1x1xf32>
      tpu.vector_store %arg8[%c0_35, %c0_36], %64 {strides = array<i32>} : memref<1x1xf32, #tpu.memory_space<vmem>>, vector<1x1xf32>,
    } else {
    }
    %c0 = arith.constant 0 : index
    %c0_1 = arith.constant 0 : index
    %3 = vector.load %arg1[%c0, %c0_1] : memref<2x512xf32, #tpu.memory_space<vmem>>, vector<2x512xf32>
    %c0_2 = arith.constant 0 : index
    %c0_3 = arith.constant 0 : index
    %4 = vector.load %arg2[%c0_2, %c0_3] : memref<2x512xf32, #tpu.memory_space<vmem>>, vector<2x512xf32>
    %5 = arith.subf %3, %4 : vector<2x512xf32>
    %6 = arith.mulf %5, %5 : vector<2x512xf32>
    %7 = vector.shape_cast %6 : vector<2x512xf32> to vector<1x2x512xf32>
    %cst = arith.constant dense<0.000000e+00> : vector<1xf32>
    %8 = vector.multi_reduction <add>, %7, %cst [1, 2] : vector<1x2x512xf32> to vector<1xf32>
    %9 = vector.shape_cast %8 : vector<1xf32> to vector<1x1x1xf32>
    %10 = vector.extract %9[0, 0, 0] : f32 from vector<1x1x1xf32>
    %11 = vector.broadcast %10 : f32 to vector<1x1xf32>
    %c0_4 = arith.constant 0 : index
    %c0_5 = arith.constant 0 : index
    %12 = vector.load %arg3[%c0_4, %c0_5] : memref<4x8xf32, #tpu.memory_space<vmem>>, vector<4x8xf32>
    %c0_6 = arith.constant 0 : index
    %c0_7 = arith.constant 0 : index
    %13 = vector.load %arg4[%c0_6, %c0_7] : memref<4x8xf32, #tpu.memory_space<vmem>>, vector<4x8xf32>
    %cst_8 = arith.constant 1.000000e+00 : f32
    %14 = vector.broadcast %cst_8 : f32 to vector<4x8xf32>
    %15 = arith.addf %14, %13 : vector<4x8xf32>
    %16 = arith.mulf %12, %12 : vector<4x8xf32>
    %17 = arith.subf %15, %16 : vector<4x8xf32>
    %18 = math.exp %13 : vector<4x8xf32>
    %19 = arith.subf %17, %18 : vector<4x8xf32>
    %20 = vector.shape_cast %19 : vector<4x8xf32> to vector<1x4x8xf32>
    %cst_9 = arith.constant dense<0.000000e+00> : vector<1xf32>
    %21 = vector.multi_reduction <add>, %20, %cst_9 [1, 2] : vector<1x4x8xf32> to vector<1xf32>
    %22 = vector.shape_cast %21 : vector<1xf32> to vector<1x1x1xf32>
    %23 = vector.extract %22[0, 0, 0] : f32 from vector<1x1x1xf32>
    %24 = vector.broadcast %23 : f32 to vector<1x1xf32>
    %cst_10 = arith.constant -5.000000e-01 : f32
    %25 = vector.broadcast %cst_10 : f32 to vector<1x1xf32>
    %26 = arith.mulf %25, %24 : vector<1x1xf32>
    %c0_11 = arith.constant 0 : index
    %c0_12 = arith.constant 0 : index
    %27 = vector.load %arg6[%c0_11, %c0_12] : memref<1x1xf32, #tpu.memory_space<vmem>>, vector<1x1xf32>
    %cst_13 = arith.constant 5.000000e-01 : f32
    %28 = vector.broadcast %cst_13 : f32 to vector<1x1xf32>
    %29 = arith.mulf %28, %26 : vector<1x1xf32>
    %30 = arith.addf %11, %29 : vector<1x1xf32>
    %31 = arith.addf %27, %30 : vector<1x1xf32>
    %c0_14 = arith.constant 0 : index
    %c0_15 = arith.constant 0 : index
    %32 = vector.load %arg6[%c0_14, %c0_15] : memref<1x1xf32, #tpu.memory_space<vmem>>, vector<1x1xf32>
    tpu.vector_store %arg6[%c0_14, %c0_15], %31 {strides = array<i32>} : memref<1x1xf32, #tpu.memory_space<vmem>>, vector<1x1xf32>,
    %33 = vector.extract_strided_slice %4 {offsets = [0, 0], sizes = [2, 256], strides = [1, 1]} : vector<2x512xf32> to vector<2x256xf32>
    %34 = vector.extract_strided_slice %4 {offsets = [0, 256], sizes = [2, 256], strides = [1, 1]} : vector<2x512xf32> to vector<2x256xf32>
    %35 = arith.subf %33, %34 : vector<2x256xf32>
    %36 = vector.extract_strided_slice %3 {offsets = [0, 0], sizes = [2, 256], strides = [1, 1]} : vector<2x512xf32> to vector<2x256xf32>
    %37 = vector.extract_strided_slice %3 {offsets = [0, 256], sizes = [2, 256], strides = [1, 1]} : vector<2x512xf32> to vector<2x256xf32>
    %38 = arith.subf %36, %37 : vector<2x256xf32>
    %c0_16 = arith.constant 0 : index
    %c0_17 = arith.constant 0 : index
    %39 = vector.load %arg7[%c0_16, %c0_17] : memref<1x1xf32, #tpu.memory_space<vmem>>, vector<1x1xf32>
    %40 = arith.mulf %35, %35 : vector<2x256xf32>
    %41 = vector.shape_cast %40 : vector<2x256xf32> to vector<1x2x256xf32>
    %cst_18 = arith.constant dense<0.000000e+00> : vector<1xf32>
    %42 = vector.multi_reduction <add>, %41, %cst_18 [1, 2] : vector<1x2x256xf32> to vector<1xf32>
    %43 = vector.shape_cast %42 : vector<1xf32> to vector<1x1x1xf32>
    %44 = vector.extract %43[0, 0, 0] : f32 from vector<1x1x1xf32>
    %45 = vector.broadcast %44 : f32 to vector<1x1xf32>
    %46 = arith.addf %39, %45 : vector<1x1xf32>
    %c0_19 = arith.constant 0 : index
    %c0_20 = arith.constant 0 : index
    %47 = vector.load %arg7[%c0_19, %c0_20] : memref<1x1xf32, #tpu.memory_space<vmem>>, vector<1x1xf32>
    tpu.vector_store %arg7[%c0_19, %c0_20], %46 {strides = array<i32>} : memref<1x1xf32, #tpu.memory_space<vmem>>, vector<1x1xf32>,
    %c0_21 = arith.constant 0 : index
    %c0_22 = arith.constant 0 : index
    %48 = vector.load %arg8[%c0_21, %c0_22] : memref<1x1xf32, #tpu.memory_space<vmem>>, vector<1x1xf32>
    %49 = arith.mulf %38, %38 : vector<2x256xf32>
    %50 = vector.shape_cast %49 : vector<2x256xf32> to vector<1x2x256xf32>
    %cst_23 = arith.constant dense<0.000000e+00> : vector<1xf32>
    %51 = vector.multi_reduction <add>, %50, %cst_23 [1, 2] : vector<1x2x256xf32> to vector<1xf32>
    %52 = vector.shape_cast %51 : vector<1xf32> to vector<1x1x1xf32>
    %53 = vector.extract %52[0, 0, 0] : f32 from vector<1x1x1xf32>
    %54 = vector.broadcast %53 : f32 to vector<1x1xf32>
    %55 = arith.addf %48, %54 : vector<1x1xf32>
    %c0_24 = arith.constant 0 : index
    %c0_25 = arith.constant 0 : index
    %56 = vector.load %arg8[%c0_24, %c0_25] : memref<1x1xf32, #tpu.memory_space<vmem>>, vector<1x1xf32>
    tpu.vector_store %arg8[%c0_24, %c0_25], %55 {strides = array<i32>} : memref<1x1xf32, #tpu.memory_space<vmem>>, vector<1x1xf32>,
    %c0_i32_26 = arith.constant 0 : i32
    %57 = arith.cmpi eq, %arg0, %c0_i32_26 : i32
    %58 = arith.extui %57 : i1 to i32
    %c0_i32_27 = arith.constant 0 : i32
    %59 = arith.cmpi ne, %58, %c0_i32_27 : i32
    scf.if %59 {
      %c0_28 = arith.constant 0 : index
      %c0_29 = arith.constant 0 : index
      %60 = vector.load %arg6[%c0_28, %c0_29] : memref<1x1xf32, #tpu.memory_space<vmem>>, vector<1x1xf32>
      %c0_30 = arith.constant 0 : index
      %c0_31 = arith.constant 0 : index
      %61 = vector.load %arg7[%c0_30, %c0_31] : memref<1x1xf32, #tpu.memory_space<vmem>>, vector<1x1xf32>
      %c0_32 = arith.constant 0 : index
      %c0_33 = arith.constant 0 : index
      %62 = vector.load %arg8[%c0_32, %c0_33] : memref<1x1xf32, #tpu.memory_space<vmem>>, vector<1x1xf32>
      %63 = arith.subf %61, %62 : vector<1x1xf32>
      %64 = math.absf %63 : vector<1x1xf32>
      %cst_34 = arith.constant 5.000000e-01 : f32
      %65 = vector.broadcast %cst_34 : f32 to vector<1x1xf32>
      %66 = arith.mulf %65, %64 : vector<1x1xf32>
      %67 = arith.addf %60, %66 : vector<1x1xf32>
      %c0_35 = arith.constant 0 : index
      %c0_36 = arith.constant 0 : index
      %68 = vector.load %arg5[%c0_35, %c0_36] : memref<1x1xf32, #tpu.memory_space<vmem>>, vector<1x1xf32>
      tpu.vector_store %arg5[%c0_35, %c0_36], %67 {strides = array<i32>} : memref<1x1xf32, #tpu.memory_space<vmem>>, vector<1x1xf32>,
    } else {
    }
    return
  }
  func.func @transform_0(%arg0: i32) -> (i32, i32) {
    %c0_i32 = arith.constant 0 : i32
    %c0_i32_0 = arith.constant 0 : i32
    return %arg0, %c0_i32 : i32, i32
  }
  func.func @transform_1(%arg0: i32) -> (i32, i32) {
    %c0_i32 = arith.constant 0 : i32
    %c0_i32_0 = arith.constant 0 : i32
    return %arg0, %c0_i32 : i32, i32
  }
  func.func @transform_2(%arg0: i32) -> (i32, i32) {
    %c0_i32 = arith.constant 0 : i32
    %c0_i32_0 = arith.constant 0 : i32
    return %arg0, %c0_i32 : i32, i32
  }
  func.func @transform_3(%arg0: i32) -> (i32, i32) {
    %c0_i32 = arith.constant 0 : i32
    %c0_i32_0 = arith.constant 0 : i32
    return %arg0, %c0_i32 : i32, i32
  }
  func.func @transform_4(%arg0: i32) -> (i32, i32) {
    %c0_i32 = arith.constant 0 : i32
    %c0_i32_0 = arith.constant 0 : i32
    %c0_i32_1 = arith.constant 0 : i32
    return %c0_i32, %c0_i32_0 : i32, i32
  }
}

</mosaic_0001>

<llo_original>
// kernel: loss_function_forward.1
$region0: #{loss_function_forward.1}
  #allocation0 [shape = 'u32[]', space=smem, size = 0x4, offset = 0x4, fixed_abs, tag = 'smem constant byte address 0x4 - core index']
  #allocation1 [shape = 'u32[144,128]{1,0:T(1,128)}', space=vmem, size = 0x12000, scoped, tag = 'internal scratch']
  #allocation2 [shape = 'f32[1,1]{1,0:T(1,128)}', space=vmem, size = 0x200, scoped, tag = 'scratch operand']
  #allocation3 [shape = 'f32[1,1]{1,0:T(1,128)}', space=vmem, size = 0x200, scoped, tag = 'scratch operand']
  #allocation4 [shape = 'f32[1,1]{1,0:T(1,128)}', space=vmem, size = 0x200, scoped, tag = 'scratch operand']
  %s0 = inlined_call_operand.vmem [shape: f32[2,512], index: 0, kind: input, shape index: {}]
  %s1 = inlined_call_operand.vmem [shape: f32[2,512], index: 1, kind: input, shape index: {}]
  %s2 = inlined_call_operand.vmem [shape: f32[4,8], index: 2, kind: input, shape index: {}]
  %s3 = inlined_call_operand.vmem [shape: f32[4,8], index: 3, kind: input, shape index: {}]
  %s4 = inlined_call_operand.hbm [shape: f32[1,1], index: 4, kind: output, shape index: {}]
  %s5 = sld [smem:[#allocation0]]
  $region34: #{loss_function_forward.1} parent=0
    _
  %s7 = ssub.s32 1, %s5
  %s8 = scalar_select 0, %s7, %s5
  $region1: #{loss_function_forward.1} parent=0
    #allocation5 [shape = 'u8[512]{0}', space=vmem, size = 0x400, scoped, tag = 'output window, operand 0, single buffered']
    #allocation6 [shape = 's32[1]{0}', space=sflag, size = 0x4, scoped, tag = 'scoped memory for loss_function_forward.1']
    %9 = vsyncpa [#allocation6], 0
    // Predicated region
    $region2: #{loss_function_forward.1} parent=1 // pred_check
      _
    $region3: #{loss_function_forward.1} parent=1 // pred_check_branch
      %11 = sbr.rel (0) target = $region5
    $region4: #{loss_function_forward.1} parent=1 // pred_region
      _
    $region5: #{loss_function_forward.1} parent=1 // pred_fallthru
      _
    // Predicated region
    $region6: #{loss_function_forward.1} parent=1 // pred_check
      _
    $region7: #{loss_function_forward.1} parent=1 // pred_check_branch
      %13 = sbr.rel (0) target = $region9
    $region8: #{loss_function_forward.1} parent=1 // pred_region
      _
    $region9: #{loss_function_forward.1} parent=1 // pred_fallthru
      _
    // Predicated region
    $region10: #{loss_function_forward.1} parent=1 // pred_check
      _
    $region11: #{loss_function_forward.1} parent=1 // pred_check_branch
      %15 = sbr.rel (0) target = $region13
    $region12: #{loss_function_forward.1} parent=1 // pred_region
      _
    $region13: #{loss_function_forward.1} parent=1 // pred_fallthru
      _
    // Predicated region
    $region14: #{loss_function_forward.1} parent=1 // pred_check
      _
    $region15: #{loss_function_forward.1} parent=1 // pred_check_branch
      %17 = sbr.rel (0) target = $region17
    $region16: #{loss_function_forward.1} parent=1 // pred_region
      _
    $region17: #{loss_function_forward.1} parent=1 // pred_fallthru
      _
    %p18 = scmp.eq.s32.totalorder 0, 0
    // Predicated region
    $region18: #{loss_function_forward.1} parent=1 // pred_check
      %p19 = pneg %p18
    $region19: #{loss_function_forward.1} parent=1 // pred_check_branch
      %21 = sbr.rel (%p19) target = $region21
    $region20: #{loss_function_forward.1} parent=1 // pred_region
      %vm22 = vcmask 0
      %23 = vst.msk [vmem:[#allocation2] sm:$0x1] %vm22, 0.0
      %24 = vst.msk [vmem:[#allocation3] sm:$0x1] %vm22, 0.0
      %25 = vst.msk [vmem:[#allocation4] sm:$0x1] %vm22, 0.0
    $region21: #{loss_function_forward.1} parent=1 // pred_fallthru
      _
    %v26 = vld [vmem:[%s0] sm:$0xff]
    %v27 = vld [vmem:[%s1] sm:$0xff]
    %v28 = vsub.f32 %v26, %v27
    %v29 = vmul.f32 %v28, %v28
    %v31 = vcombine.high %v29, %v29
    %v33 = vunpack.c.l.s4 1983009808
    %v34 = vunpack.c.0.s8 %v33
    %v35 = vlaneseq
    %v36 = vshrl.u32 %v35, 7
    %v37 = vsub.s32 %v34, %v36
    %v38 = vrot.slane %v29, %v37
    %v40 = vunpack.c.l.s4 1983009808
    %v41 = vunpack.c.0.s8 %v40
    %v42 = vlaneseq
    %v43 = vshrl.u32 %v42, 7
    %v44 = vsub.s32 %v41, %v43
    %v45 = vrot.slane %v31, %v44
    %v46 = vcombine.high %v38, %v38
    %v47 = vcombine.high %v45, %v45
    %vm52 = vcmask 1041408
    %v53 = vsel %vm52, %v38, 0.0
    %v54 = vsel %vm52, %v46, 0.0
    %v55 = vadd.f32 %v53, %v54
    %v56 = vsel %vm52, %v45, 0.0
    %v57 = vadd.f32 %v55, %v56
    %v58 = vsel %vm52, %v47, 0.0
    %v59 = vadd.f32 %v57, %v58
    %60 = vadd.xlane.f32.xlu0 %v59
    %v61 = vpop.xlane.xlu0 %60
    %v62 = vrot.slane %v61, 4
    %v63 = vadd.f32 %v61, %v62
    %v64 = vrot.slane %v63, 2
    %v65 = vadd.f32 %v63, %v64
    %v66 = vrot.slane %v65, 1
    %v67 = vadd.f32 %v65, %v66
    %s68 = vtos %v67
    %v69 = vstv %s68
    %v70 = vld [vmem:[%s2] sm:$0xf]
    %v71 = vld [vmem:[%s3] sm:$0xf]
    %v72 = vadd.f32 %v71, 1.0
    %v73 = vmul.f32 %v70, %v70
    %v74 = vsub.f32 %v72, %v73
    %v75 = vmul.f32 %v71, 1.442695
    %v76 = vpow.pop %v75
    %v77 = vsub.f32 %v74, %v76
    %vm78 = vcmask 60416
    %v79 = vsel %vm78, %v77, 0.0
    %80 = vadd.xlane.f32.xlu0 %v79
    %v81 = vpop.xlane.xlu0 %80
    %v82 = vrot.slane %v81, 4
    %v83 = vadd.f32 %v81, %v82
    %v84 = vrot.slane %v83, 2
    %v85 = vadd.f32 %v83, %v84
    %v86 = vrot.slane %v85, 1
    %v87 = vadd.f32 %v85, %v86
    %s88 = vtos %v87
    %v89 = vstv %s88
    %v90 = vmul.f32 %v89, -0.5
    %v91 = vld [vmem:[#allocation2] sm:$0x1]
    %v92 = vmul.f32 %v90, 0.5
    %v93 = vadd.f32 %v69, %v92
    %v94 = vadd.f32 %v91, %v93
    %vm95 = vcmask 0
    %96 = vst.msk [vmem:[#allocation2] sm:$0x1] %vm95, %v94
    %v98 = vrot.slane %v27, 4
    %v100 = vsub.f32 %v27, %v98
    %v102 = vrot.slane %v26, 4
    %v104 = vsub.f32 %v26, %v102
    %v105 = vld [vmem:[#allocation3] sm:$0x1]
    %v106 = vmul.f32 %v100, %v100
    %v109 = vunpack.c.l.s4 1983009808
    %v110 = vunpack.c.0.s8 %v109
    %v111 = vlaneseq
    %v112 = vshrl.u32 %v111, 7
    %v113 = vsub.s32 %v110, %v112
    %v114 = vrot.slane %v106, %v113
    %v115 = vcombine.high %v114, %v114
    %v118 = vsel %vm52, %v114, 0.0
    %v119 = vsel %vm52, %v115, 0.0
    %v120 = vadd.f32 %v118, %v119
    %121 = vadd.xlane.f32.xlu0 %v120
    %v122 = vpop.xlane.xlu0 %121
    %v123 = vrot.slane %v122, 4
    %v124 = vadd.f32 %v122, %v123
    %v125 = vrot.slane %v124, 2
    %v126 = vadd.f32 %v124, %v125
    %v127 = vrot.slane %v126, 1
    %v128 = vadd.f32 %v126, %v127
    %s129 = vtos %v128
    %v130 = vstv %s129
    %v131 = vadd.f32 %v105, %v130
    %132 = vst.msk [vmem:[#allocation3] sm:$0x1] %vm95, %v131
    %v133 = vld [vmem:[#allocation4] sm:$0x1]
    %v134 = vmul.f32 %v104, %v104
    %v137 = vunpack.c.l.s4 1983009808
    %v138 = vunpack.c.0.s8 %v137
    %v139 = vlaneseq
    %v140 = vshrl.u32 %v139, 7
    %v141 = vsub.s32 %v138, %v140
    %v142 = vrot.slane %v134, %v141
    %v143 = vcombine.high %v142, %v142
    %v146 = vsel %vm52, %v142, 0.0
    %v147 = vsel %vm52, %v143, 0.0
    %v148 = vadd.f32 %v146, %v147
    %149 = vadd.xlane.f32.xlu0 %v148
    %v150 = vpop.xlane.xlu0 %149
    %v151 = vrot.slane %v150, 4
    %v152 = vadd.f32 %v150, %v151
    %v153 = vrot.slane %v152, 2
    %v154 = vadd.f32 %v152, %v153
    %v155 = vrot.slane %v154, 1
    %v156 = vadd.f32 %v154, %v155
    %s157 = vtos %v156
    %v158 = vstv %s157
    %v159 = vadd.f32 %v133, %v158
    %160 = vst.msk [vmem:[#allocation4] sm:$0x1] %vm95, %v159
    // Predicated region
    $region22: #{loss_function_forward.1} parent=1 // pred_check
      %p161 = pneg %p18
    $region23: #{loss_function_forward.1} parent=1 // pred_check_branch
      %163 = sbr.rel (%p161) target = $region25
    $region24: #{loss_function_forward.1} parent=1 // pred_region
      %v164 = vld [vmem:[#allocation2] sm:$0x1]
      %v165 = vld [vmem:[#allocation3] sm:$0x1]
      %v166 = vld [vmem:[#allocation4] sm:$0x1]
      %v167 = vsub.f32 %v165, %v166
      %v168 = vand.u32 2147483647, %v167
      %v169 = vmul.f32 %v168, 0.5
      %v170 = vadd.f32 %v164, %v169
      %171 = vst.msk [vmem:[#allocation5] sm:$0x1] %vm95, %v170
    $region25: #{loss_function_forward.1} parent=1 // pred_fallthru
      _
    // Predicated region
    $region26: #{loss_function_forward.1} parent=1 // pred_check
      _
    $region27: #{loss_function_forward.1} parent=1 // pred_check_branch
      %173 = sbr.rel (0) target = $region29
    $region28: #{loss_function_forward.1} parent=1 // pred_region
      %s175 = ssub.s32 16, 16
      %176 = vsyncadd [#allocation6], %s175
      %s178 = sshll.u32 [#allocation5], 4
      %s179 = int_to_ptr.vmem [resolvable:$true] %s178
      %181 = dma.vmem_to_hbm [thread:$0]  %s179, 16, %s4, [#allocation6]
    $region29: #{loss_function_forward.1} parent=1 // pred_fallthru
      _
    // Predicated region
    $region30: #{loss_function_forward.1} parent=1 // pred_check
      _
    $region31: #{loss_function_forward.1} parent=1 // pred_check_branch
      %183 = sbr.rel (0) target = $region33
    $region32: #{loss_function_forward.1} parent=1 // pred_region
      %184 = dma.done [#allocation6], 16
    $region33: #{loss_function_forward.1} parent=1 // pred_fallthru
      _
    %185 = vsyncpa [#allocation6], 1

</llo_original>
